<compile_context>
chip_gen: v5e
topology: v5e:2x2
jax: 0.10.0
libtpu: 0.0.40
codegen_flags: <defaults>
</compile_context>

<pallas_src>
import functools
import math

import jax
import jax.numpy as jnp
from jax import lax
from jax.experimental import pallas as pl
from jax.experimental.pallas import tpu as pltpu


_LANE = 128
_SUBLANE = 8
_TARGET_TILE_BYTES = 1 << 20           # ~1 MiB per streamed buffer

# lowbias32 mixer constants, expressed as two's-complement int32.
_MIX_M1 = 0x7FEB352D                    #  2145854765
_MIX_M2 = 0x846CA68B - (1 << 32)        # -2073319797
_GOLDEN = 0x9E3779B9 - (1 << 32)        # -1640531527
_SIGN_BIT = -(1 << 31)                  # 0x80000000 as int32


# ----------------------------------------------------------------------------
# Parameter (buffer) construction — deterministic, mirrors nn.Module.__init__
# ----------------------------------------------------------------------------
def make_positional_encoding_table(max_len, d_model, dtype=jnp.float32):
    pos = jnp.arange(max_len, dtype=jnp.float32)[:, None]                      # (max_len, 1)
    div = jnp.exp(jnp.arange(0, d_model, 2, dtype=jnp.float32)
                  * (-math.log(10000.0) / d_model))                            # (d_model/2,)
    ang = pos * div                                                            # (max_len, d_model/2)
    pe = jnp.zeros((max_len, d_model), jnp.float32)
    pe = pe.at[:, 0::2].set(jnp.sin(ang))
    pe = pe.at[:, 1::2].set(jnp.cos(ang))
    return pe.astype(dtype)


# ----------------------------------------------------------------------------
# In-kernel stateless RNG helpers (int32 only — works on Mosaic and interpret)
# ----------------------------------------------------------------------------
def _lsr(x, s):
    """Logical shift-right of an int32 array by static s (arith shift + mask)."""
    return (x >> s) & jnp.int32((1 << (32 - s)) - 1)


def _mix32(x):
    """lowbias32 integer mixer (wrap-around int32 arithmetic)."""
    x = x ^ _lsr(x, 16)
    x = x * jnp.int32(_MIX_M1)
    x = x ^ _lsr(x, 15)
    x = x * jnp.int32(_MIX_M2)
    x = x ^ _lsr(x, 16)
    return x


# ----------------------------------------------------------------------------
# Kernels
# ----------------------------------------------------------------------------
def _pe_add_kernel(x_ref, pe_ref, o_ref):
    # eval-mode forward: broadcasted add of the positional table.
    o_ref[...] = (x_ref[...] + pe_ref[...]).astype(o_ref.dtype)


def _pe_add_dropout_kernel(seed_ref, x_ref, pe_ref, o_ref, *,
                           signed_threshold, inv_keep):
    # training-mode forward: add + inverted dropout, mask drawn on-chip from a
    # stateless counter-based hash (unique counter per element, seed-mixed).
    y = x_ref[...] + pe_ref[...]
    shape = y.shape

    # unique per-element counter = block_id * block_size + intra-block index
    blk = pl.program_id(0) * pl.num_programs(1) + pl.program_id(1)        # int32
    sub = lax.broadcasted_iota(jnp.int32, shape, len(shape) - 2)
    lane = lax.broadcasted_iota(jnp.int32, shape, len(shape) - 1)
    intra = sub * jnp.int32(shape[-1]) + lane
    block_size = 1
    for d in shape:
        block_size *= d
    ctr = intra + blk * jnp.int32(block_size & 0x7FFFFFFF)

    seed = seed_ref[0]
    bits = _mix32(_mix32(ctr ^ (seed * jnp.int32(_GOLDEN))) + seed)

    # unsigned compare via sign-bit flip: keep iff u32(bits) < keep_prob * 2^32
    keep = (bits ^ jnp.int32(_SIGN_BIT)) < jnp.int32(signed_threshold)
    scaled = y * jnp.asarray(inv_keep, dtype=y.dtype)
    o_ref[...] = jnp.where(keep, scaled, jnp.zeros_like(scaled)).astype(o_ref.dtype)


# ----------------------------------------------------------------------------
# Tiling helpers
# ----------------------------------------------------------------------------
def _pick_seq_tile(S, D, itemsize):
    """Sequence rows per tile: multiple of 8 (or full S), ~1 MiB of (TS, D)."""
    rows = (_TARGET_TILE_BYTES // max(1, D * itemsize)) // _SUBLANE * _SUBLANE
    rows = max(_SUBLANE, rows)
    return min(S, rows)


def _pick_col_tile(B, N, itemsize):
    """Columns per tile for the flattened (B, N) layout: multiple of 128 that
    divides N, keeping the (B, TC) block around ~1 MiB. None if impossible."""
    if N % _LANE != 0:
        return None
    budget = max(_LANE, _TARGET_TILE_BYTES // max(1, B * itemsize))
    best = None
    c = _LANE
    while c <= min(N, budget):
        if N % c == 0:
            best = c
        c += _LANE
    return best


# ----------------------------------------------------------------------------
# Wrapper
# ----------------------------------------------------------------------------
def positional_encoding(x, pe_table, *, dropout_rate=0.1, training=False, seed=0):
    """x: (B, S, D); pe_table: (max_len, D) with max_len >= S."""
    B, S, D = x.shape
    pe_slice = pe_table[:S].astype(x.dtype)          # cast once in HBM
    itemsize = x.dtype.itemsize

    drop = training and dropout_rate > 0.0
    if drop and dropout_rate >= 1.0:                 # nn.Dropout(p=1) -> all zeros
        return jnp.zeros_like(x)

    # ---- layout & tiling ----------------------------------------------------
    TC = _pick_col_tile(B, S * D, itemsize) if (D % _LANE != 0) else None
    if TC is not None:
        # Lane-dense flattened layout: (B, S*D) tiled along columns; the pe
        # tile covers the same column window and is read once per column tile.
        N = S * D
        x_in, pe_in = x.reshape(B, N), pe_slice.reshape(1, N)
        grid = (N // TC, 1)                          # dummy inner axis -> rank-2 grid
        x_bs, pe_bs = (B, TC), (1, TC)
        x_map = lambda c, z, *pref: (0, c)
        pe_map = lambda c, z, *pref: (0, c)
        out_struct = jax.ShapeDtypeStruct((B, N), x.dtype)
        reshape_back = lambda o: o.reshape(B, S, D)
        dims = ("parallel", "arbitrary")
    else:
        # (B, S, D) tiled over the sequence axis; pe block index depends only
        # on the outer s axis, so it stays VMEM-resident across the batch loop.
        TS = _pick_seq_tile(S, D, itemsize)
        x_in, pe_in = x, pe_slice
        grid = (pl.cdiv(S, TS), B)
        x_bs, pe_bs = (1, TS, D), (TS, D)
        x_map = lambda s, b, *pref: (b, s, 0)
        pe_map = lambda s, b, *pref: (s, 0)
        out_struct = jax.ShapeDtypeStruct((B, S, D), x.dtype)
        reshape_back = lambda o: o
        dims = ("parallel", "parallel")

    cparams = pltpu.CompilerParams(
        dimension_semantics=dims,
        vmem_limit_bytes=32 * 1024 * 1024,
    )

    if not drop:
        out = pl.pallas_call(
            _pe_add_kernel,
            out_shape=out_struct,
            grid_spec=pltpu.PrefetchScalarGridSpec(
                num_scalar_prefetch=0,
                grid=grid,
                in_specs=[pl.BlockSpec(x_bs, x_map),
                          pl.BlockSpec(pe_bs, pe_map)],
                out_specs=pl.BlockSpec(x_bs, x_map)),
            compiler_params=cparams,
            input_output_aliases={0: 0},             # overwrite x in place
        )(x_in, pe_in)
        return reshape_back(out)

    # NOTE: dropout is stochastic — it cannot match torch's RNG bit-for-bit;
    # statistics (keep-prob, 1/(1-p) rescale) match nn.Dropout.
    keep_prob = 1.0 - float(dropout_rate)
    thr_u32 = min(int(round(keep_prob * 2.0 ** 32)), 2 ** 32 - 1)
    kernel = functools.partial(
        _pe_add_dropout_kernel,
        signed_threshold=thr_u32 - 2 ** 31,
        inv_keep=1.0 / keep_prob,
    )
    seed_arr = jnp.asarray([seed], dtype=jnp.int32)
    out = pl.pallas_call(
        kernel,
        out_shape=out_struct,
        grid_spec=pltpu.PrefetchScalarGridSpec(
            num_scalar_prefetch=1,
            grid=grid,
            in_specs=[pl.BlockSpec(x_bs, x_map),
                      pl.BlockSpec(pe_bs, pe_map)],
            out_specs=pl.BlockSpec(x_bs, x_map)),
        compiler_params=cparams,
        input_output_aliases={1: 0},                 # x (after the seed operand)
    )(seed_arr, x_in, pe_in)
    return reshape_back(out)


# ----------------------------------------------------------------------------
# Main
# ----------------------------------------------------------------------------
if __name__ == "__main__":
    B, S, D = 2, 8, 32
    MAX_LEN = 5000
    DROPOUT = 0.1

    key = jax.random.PRNGKey(0)
    x = jax.random.normal(key, (B, S, D), dtype=jnp.float32)
    pe_table = make_positional_encoding_table(MAX_LEN, D)

    # Eval-mode forward (dropout = identity) — numerically checked vs reference.
    out_eval = jax.block_until_ready(
        positional_encoding(x, pe_table, dropout_rate=DROPOUT, training=False))
    ref = x + pe_table[None, :S, :]
    assert out_eval.shape == x.shape and out_eval.dtype == x.dtype
    assert jnp.allclose(out_eval, ref, atol=1e-6, rtol=1e-6)

    # Training-mode forward (in-kernel inverted dropout) — structural checks:
    # kept elements equal ref / keep_prob, dropped elements are exactly zero.
    out_train = jax.block_until_ready(
        positional_encoding(x, pe_table, dropout_rate=DROPOUT, training=True, seed=0))
    assert out_train.shape == x.shape and out_train.dtype == x.dtype
    kept = out_train != 0
    assert jnp.allclose(jnp.where(kept, out_train, 0.0),
                        jnp.where(kept, ref / (1.0 - DROPOUT), 0.0),
                        atol=1e-5, rtol=1e-5)

    print("KERNEL_OK")
</pallas_src>

<mosaic_0001>
module attributes {stable_mosaic.version = 11 : i64} {
  func.func @_pe_add_kernel(%arg0: i32, %arg1: i32, %arg2: memref<2x256xf32, #tpu.memory_space<vmem>>, %arg3: memref<1x256xf32, #tpu.memory_space<vmem>>, %arg4: memref<2x256xf32, #tpu.memory_space<vmem>>) attributes {dimension_semantics = [#tpu.dimension_semantics<parallel>, #tpu.dimension_semantics<arbitrary>], iteration_bounds = array<i64: 1, 1>, scalar_prefetch = 0 : i64, scratch_operands = 0 : i64, tpu.core_type = #tpu.core_type<tc>, window_params = [{transform_indices = @transform_0, window_bounds = array<i64: 2, 256>}, {transform_indices = @transform_1, window_bounds = array<i64: 1, 256>}, {transform_indices = @transform_2, window_bounds = array<i64: 2, 256>}]} {
    %c0 = arith.constant 0 : index
    %c0_0 = arith.constant 0 : index
    %0 = vector.load %arg2[%c0, %c0_0] : memref<2x256xf32, #tpu.memory_space<vmem>>, vector<2x256xf32>
    %c0_1 = arith.constant 0 : index
    %c0_2 = arith.constant 0 : index
    %1 = vector.load %arg3[%c0_1, %c0_2] : memref<1x256xf32, #tpu.memory_space<vmem>>, vector<1x256xf32>
    %2 = vector.broadcast %1 : vector<1x256xf32> to vector<2x256xf32>
    %3 = arith.addf %0, %2 : vector<2x256xf32>
    %c0_3 = arith.constant 0 : index
    %c0_4 = arith.constant 0 : index
    %4 = vector.load %arg4[%c0_3, %c0_4] : memref<2x256xf32, #tpu.memory_space<vmem>>, vector<2x256xf32>
    tpu.vector_store %arg4[%c0_3, %c0_4], %3 {strides = array<i32>} : memref<2x256xf32, #tpu.memory_space<vmem>>, vector<2x256xf32>,
    return
  }
  func.func @transform_0(%arg0: i32, %arg1: i32) -> (i32, i32) {
    %c0_i32 = arith.constant 0 : i32
    %c0_i32_0 = arith.constant 0 : i32
    return %c0_i32, %arg0 : i32, i32
  }
  func.func @transform_1(%arg0: i32, %arg1: i32) -> (i32, i32) {
    %c0_i32 = arith.constant 0 : i32
    %c0_i32_0 = arith.constant 0 : i32
    return %c0_i32, %arg0 : i32, i32
  }
  func.func @transform_2(%arg0: i32, %arg1: i32) -> (i32, i32) {
    %c0_i32 = arith.constant 0 : i32
    %c0_i32_0 = arith.constant 0 : i32
    return %c0_i32, %arg0 : i32, i32
  }
}

</mosaic_0001>

<llo_original>
// kernel: tpu_custom_call.1
$region0: #{tpu_custom_call.1}
  #allocation0 [shape = 'u32[]', space=smem, size = 0x4, offset = 0x4, fixed_abs, tag = 'smem constant byte address 0x4 - core index']
  #allocation1 [shape = 'u32[72,128]{1,0:T(1,128)}', space=vmem, size = 0x9000, scoped, tag = 'internal scratch']
  %s0 = inlined_call_operand.hbm [shape: f32[2,256], index: 0, kind: input, shape index: {}, may-alias: {0,2}]
  %s1 = inlined_call_operand.vmem [shape: f32[1,256], index: 1, kind: input, shape index: {}]
  %s2 = inlined_call_operand.hbm [shape: f32[2,256], index: 2, kind: output, shape index: {}, may-alias: {0,2}]
  %s3 = sld [smem:[#allocation0]]
  $region22: #{tpu_custom_call.1} parent=0
    _
  %s5 = ssub.s32 1, %s3
  %s6 = scalar_select 0, %s5, %s3
  $region1: #{tpu_custom_call.1} parent=0
    #allocation2 [shape = 'u8[2048]{0}', space=vmem, size = 0x800, scoped, tag = 'input window, operand 0, single buffered']
    #allocation3 [shape = 's32[1]{0}', space=sflag, size = 0x4, scoped, tag = 'scoped memory for tpu_custom_call.1']
    #allocation4 [shape = 's32[1]{0}', space=sflag, size = 0x4, scoped, tag = 'scoped memory for tpu_custom_call.1']
    #allocation5 [shape = 'u8[2048]{0}', space=vmem, size = 0x800, scoped, tag = 'output window, operand 0, single buffered']
    %7 = vsyncpa [#allocation3], 0
    %8 = vsyncpa [#allocation4], 0
    // Predicated region
    $region2: #{tpu_custom_call.1} parent=1 // pred_check
      _
    $region3: #{tpu_custom_call.1} parent=1 // pred_check_branch
      %10 = sbr.rel (0) target = $region5
    $region4: #{tpu_custom_call.1} parent=1 // pred_region
      %12 = vsyncadd [#allocation3], 0
      %s14 = sshll.u32 %s0, 4
      %s15 = int_to_ptr.hbm [resolvable:$true] %s14
      %s16 = sshll.u32 [#allocation2], 4
      %s17 = int_to_ptr.vmem [resolvable:$true] %s16
      %19 = dma.hbm_to_vmem [thread:$0]  %s15, 64, %s17, [#allocation3]
    $region5: #{tpu_custom_call.1} parent=1 // pred_fallthru
      _
    // Predicated region
    $region6: #{tpu_custom_call.1} parent=1 // pred_check
      _
    $region7: #{tpu_custom_call.1} parent=1 // pred_check_branch
      %21 = sbr.rel (0) target = $region9
    $region8: #{tpu_custom_call.1} parent=1 // pred_region
      _
    $region9: #{tpu_custom_call.1} parent=1 // pred_fallthru
      _
    // Predicated region
    $region10: #{tpu_custom_call.1} parent=1 // pred_check
      _
    $region11: #{tpu_custom_call.1} parent=1 // pred_check_branch
      %23 = sbr.rel (0) target = $region13
    $region12: #{tpu_custom_call.1} parent=1 // pred_region
      %25 = dma.done [#allocation3], 64
    $region13: #{tpu_custom_call.1} parent=1 // pred_fallthru
      _
    %v26 = vld [vmem:[#allocation2] sm:$0xf]
    %v27 = vld [vmem:[%s1] sm:$0x3]
    %v29 = vperm.slane %v27, 0
    %v30 = vperm.slane %v27, 1
    %v31 = vrot.slane %v30, 6
    %vm32 = vcmask 1041408
    %v33 = vsel %vm32, %v29, %v31
    %v35 = vadd.f32 %v26, %v33
    %36 = vst [vmem:[#allocation5] sm:$0xf] %v35
    // Predicated region
    $region14: #{tpu_custom_call.1} parent=1 // pred_check
      _
    $region15: #{tpu_custom_call.1} parent=1 // pred_check_branch
      %38 = sbr.rel (0) target = $region17
    $region16: #{tpu_custom_call.1} parent=1 // pred_region
      %40 = vsyncadd [#allocation4], 0
      %s42 = sshll.u32 [#allocation5], 4
      %s43 = int_to_ptr.vmem [resolvable:$true] %s42
      %s44 = sshll.u32 %s2, 4
      %s45 = int_to_ptr.hbm [resolvable:$true] %s44
      %47 = dma.vmem_to_hbm [thread:$0]  %s43, 64, %s45, [#allocation4]
    $region17: #{tpu_custom_call.1} parent=1 // pred_fallthru
      _
    // Predicated region
    $region18: #{tpu_custom_call.1} parent=1 // pred_check
      _
    $region19: #{tpu_custom_call.1} parent=1 // pred_check_branch
      %49 = sbr.rel (0) target = $region21
    $region20: #{tpu_custom_call.1} parent=1 // pred_region
      %51 = dma.done [#allocation4], 64
    $region21: #{tpu_custom_call.1} parent=1 // pred_fallthru
      _
    %52 = vsyncpa [#allocation3], 1
    %53 = vsyncpa [#allocation4], 1

</llo_original>
